<compile_context>
chip_gen: v7x
topology: tpu7x:2x2x1
jax: 0.10.0
libtpu: 0.0.40
codegen_flags: <defaults>
</compile_context>

<pallas_src>
import math

import jax
import jax.numpy as jnp
from jax.experimental import pallas as pl
from jax.experimental.pallas import tpu as pltpu


# ---------------------------------------------------------------------------
# Kernels: grid = (row tile i [parallel], d_ff tile j [arbitrary, reduction])
# ---------------------------------------------------------------------------
def _swiglu_kernel_out_acc(x_ref, w1_ref, w3_ref, w2t_ref, o_ref):
    """Output dtype is f32 -> accumulate directly into the resident out tile.

    x_ref  : (tm, d_model)   row tile of the flattened input
    w1_ref : (d_model, tf)   columns [j*tf, (j+1)*tf) of W1^T   (MXU-ready)
    w3_ref : (d_model, tf)   columns [j*tf, (j+1)*tf) of W3^T
    w2t_ref: (tf, d_model)   rows    [j*tf, (j+1)*tf) of W2^T
    o_ref  : (tm, d_model)   f32 output tile, resident across the j axis
    """
    j = pl.program_id(1)

    @pl.when(j == 0)
    def _():
        o_ref[...] = jnp.zeros_like(o_ref)

    x = x_ref[...]
    h1 = jnp.dot(x, w1_ref[...], preferred_element_type=jnp.float32)
    h3 = jnp.dot(x, w3_ref[...], preferred_element_type=jnp.float32)
    h = (h1 * jax.nn.sigmoid(h1)) * h3            # SiLU gate in f32 (EUP sigmoid)
    o_ref[...] += jnp.dot(h.astype(w2t_ref.dtype), w2t_ref[...],
                          preferred_element_type=jnp.float32)


def _swiglu_kernel_scratch_acc(x_ref, w1_ref, w3_ref, w2t_ref, o_ref, acc_ref):
    """Same computation with a separate f32 accumulator (narrow output dtypes)."""
    j = pl.program_id(1)

    @pl.when(j == 0)
    def _():
        acc_ref[...] = jnp.zeros_like(acc_ref)

    x = x_ref[...]
    h1 = jnp.dot(x, w1_ref[...], preferred_element_type=jnp.float32)
    h3 = jnp.dot(x, w3_ref[...], preferred_element_type=jnp.float32)
    h = (h1 * jax.nn.sigmoid(h1)) * h3
    acc_ref[...] += jnp.dot(h.astype(w2t_ref.dtype), w2t_ref[...],
                            preferred_element_type=jnp.float32)

    @pl.when(j == pl.num_programs(1) - 1)
    def _():
        o_ref[...] = acc_ref[...].astype(o_ref.dtype)


# ---------------------------------------------------------------------------
# Tile selection
# ---------------------------------------------------------------------------
def _pick_tm(m):
    """Largest MXU-friendly row tile <= 256 dividing M, preferring >= 2 row
    steps so the parallel grid axis can feed both v7x TensorCores."""
    fallback = None
    for cand in (256, 128, 64, 32, 16):
        if m % cand:
            continue
        if m // cand >= 2:
            return cand
        if fallback is None:
            fallback = cand
    return fallback if fallback is not None else m


def _pick_tf(d_ff):
    """Largest lane-aligned d_ff tile <= 512 dividing d_ff (512 keeps the
    working set inside v7x's 64 MiB VMEM; pass tf=1024 explicitly on v6e)."""
    for cand in (512, 256, 128):
        if d_ff % cand == 0:
            return cand
    return d_ff


# ---------------------------------------------------------------------------
# Wrapper
# ---------------------------------------------------------------------------
def swiglu(x, w1, w2, w3, *, tm=None, tf=None, compute_dtype=jnp.bfloat16):
    """Fused SwiGLU forward: y = (swish(x @ w1.T) * (x @ w3.T)) @ w2.T.

    x      : (..., d_model)
    w1, w3 : (d_ff, d_model)   (PyTorch Linear layout)
    w2     : (d_model, d_ff)

    The weight transposes/casts below are pure layout prep: under jit on fixed
    weights they are hoisted, and in a real model you would store the weights
    pre-transposed once at init rather than per forward.
    """
    d_ff, d_model = w1.shape
    assert w3.shape == (d_ff, d_model)
    assert w2.shape == (d_model, d_ff)
    assert x.shape[-1] == d_model

    out_dtype = x.dtype
    orig_shape = x.shape
    M = math.prod(orig_shape[:-1])

    x2d = x.reshape(M, d_model).astype(compute_dtype)
    w1t = w1.T.astype(compute_dtype)   # (d_model, d_ff) -> MXU consumes directly
    w3t = w3.T.astype(compute_dtype)   # (d_model, d_ff)
    w2t = w2.T.astype(compute_dtype)   # (d_ff, d_model)

    tm = _pick_tm(M) if tm is None else tm
    tf = _pick_tf(d_ff) if tf is None else tf
    assert M % tm == 0 and d_ff % tf == 0
    assert tm == M or tm % 8 == 0, "row tile must be sublane-aligned"
    assert tf == d_ff or tf % 128 == 0, "d_ff tile must be lane-aligned"

    grid = (M // tm, d_ff // tf)
    out_is_f32 = jnp.dtype(out_dtype) == jnp.dtype(jnp.float32)
    kernel = _swiglu_kernel_out_acc if out_is_f32 else _swiglu_kernel_scratch_acc
    scratch = [] if out_is_f32 else [pltpu.VMEM((tm, d_model), jnp.float32)]

    cb = jnp.dtype(compute_dtype).itemsize
    ob = jnp.dtype(out_dtype).itemsize
    # Double-buffered per-step working set: x tile, three weight streams, out tile.
    working = (2 * tm * d_model * cb
               + 3 * 2 * tf * d_model * cb
               + 2 * tm * d_model * ob
               + (0 if out_is_f32 else tm * d_model * 4))
    vmem_limit = min(max(int(working * 1.5), 32 << 20), 100 << 20)

    cost = pl.CostEstimate(
        flops=6 * M * d_ff * d_model,            # three matmuls
        transcendentals=M * d_ff,                # sigmoid
        bytes_accessed=(x2d.size * cb
                        + grid[0] * (w1t.size + w3t.size + w2t.size) * cb
                        + M * d_model * ob),
    )

    out = pl.pallas_call(
        kernel,
        out_shape=jax.ShapeDtypeStruct((M, d_model), out_dtype),
        grid_spec=pltpu.PrefetchScalarGridSpec(
            num_scalar_prefetch=0,
            grid=grid,
            in_specs=[
                pl.BlockSpec((tm, d_model), lambda i, j: (i, 0)),   # x rows
                pl.BlockSpec((d_model, tf), lambda i, j: (0, j)),   # W1^T cols
                pl.BlockSpec((d_model, tf), lambda i, j: (0, j)),   # W3^T cols
                pl.BlockSpec((tf, d_model), lambda i, j: (j, 0)),   # W2^T rows
                # If a trace shows exposed weight DMA, add
                # pipeline_mode=pl.Buffered(3) to the three weight specs above.
            ],
            out_specs=pl.BlockSpec((tm, d_model), lambda i, j: (i, 0)),
            scratch_shapes=scratch,
        ),
        compiler_params=pltpu.CompilerParams(
            dimension_semantics=("parallel", "arbitrary"),
            vmem_limit_bytes=vmem_limit,
        ),
        cost_estimate=cost,
    )(x2d, w1t, w3t, w2t)

    return out.reshape(orig_shape)


# ---------------------------------------------------------------------------
# Init matching the PyTorch module: trunc_normal(mean=0, std=sigma^2, +-3*sigma)
# ---------------------------------------------------------------------------
def init_linear_weight(key, d_out, d_in, dtype=jnp.float32):
    sigma = (2.0 / (d_in + d_out)) ** 0.5
    std = sigma ** 2
    bound = 3.0 * sigma / std  # clip bounds expressed in standard-normal units
    w = jax.random.truncated_normal(key, -bound, bound, (d_out, d_in), jnp.float32)
    return (w * std).astype(dtype)


if __name__ == "__main__":
    key = jax.random.PRNGKey(0)
    k_x, k_w1, k_w2, k_w3 = jax.random.split(key, 4)

    batch, seq, d_model, d_ff = 2, 16, 64, 256
    x = jax.random.normal(k_x, (batch, seq, d_model), jnp.float32)
    w1 = init_linear_weight(k_w1, d_ff, d_model)   # (d_ff, d_model)
    w2 = init_linear_weight(k_w2, d_model, d_ff)   # (d_model, d_ff)
    w3 = init_linear_weight(k_w3, d_ff, d_model)   # (d_ff, d_model)

    # tm=16, tf=128 -> 2x2 grid: exercises both the parallel row axis and the
    # d_ff reduction/accumulation axis even at these toy shapes.
    y = swiglu(x, w1, w2, w3, tm=16, tf=128)
    y = jax.block_until_ready(y)

    # Reference matching the kernel's dtype path (bf16 operands, f32 accumulate).
    cd = jnp.bfloat16
    xf = x.reshape(-1, d_model).astype(cd).astype(jnp.float32)
    w1f = w1.astype(cd).astype(jnp.float32)
    w2f = w2.astype(cd).astype(jnp.float32)
    w3f = w3.astype(cd).astype(jnp.float32)
    h1 = xf @ w1f.T
    h3 = xf @ w3f.T
    h = (h1 * jax.nn.sigmoid(h1)) * h3
    h = h.astype(cd).astype(jnp.float32)
    y_ref = (h @ w2f.T).reshape(batch, seq, d_model)

    assert y.shape == (batch, seq, d_model)
    assert y.dtype == x.dtype
    assert jnp.allclose(y, y_ref, atol=5e-6, rtol=5e-3), (
        float(jnp.max(jnp.abs(y - y_ref)))
    )
    print("KERNEL_OK")
</pallas_src>

<mosaic_0001>
module attributes {stable_mosaic.version = 11 : i64} {
  func.func @_swiglu_kernel_out_acc(%arg0: i32, %arg1: i32, %arg2: memref<16x64xbf16, #tpu.memory_space<vmem>>, %arg3: memref<64x128xbf16, #tpu.memory_space<vmem>>, %arg4: memref<64x128xbf16, #tpu.memory_space<vmem>>, %arg5: memref<128x64xbf16, #tpu.memory_space<vmem>>, %arg6: memref<16x64xf32, #tpu.memory_space<vmem>>) attributes {dimension_semantics = [#tpu.dimension_semantics<parallel>, #tpu.dimension_semantics<arbitrary>], iteration_bounds = array<i64: 2, 2>, scalar_prefetch = 0 : i64, scratch_operands = 0 : i64, tpu.core_type = #tpu.core_type<tc>, window_params = [{transform_indices = @transform_0, window_bounds = array<i64: 16, 64>}, {transform_indices = @transform_1, window_bounds = array<i64: 64, 128>}, {transform_indices = @transform_2, window_bounds = array<i64: 64, 128>}, {transform_indices = @transform_3, window_bounds = array<i64: 128, 64>}, {transform_indices = @transform_4, window_bounds = array<i64: 16, 64>}]} {
    %c0_i32 = arith.constant 0 : i32
    %0 = arith.cmpi eq, %arg1, %c0_i32 : i32
    %1 = arith.extui %0 : i1 to i32
    %c0_i32_0 = arith.constant 0 : i32
    %2 = arith.cmpi ne, %1, %c0_i32_0 : i32
    scf.if %2 {
      %cst_15 = arith.constant 0.000000e+00 : f32
      %21 = vector.broadcast %cst_15 : f32 to vector<16x64xf32>
      %c0_16 = arith.constant 0 : index
      %c0_17 = arith.constant 0 : index
      %22 = vector.load %arg6[%c0_16, %c0_17] : memref<16x64xf32, #tpu.memory_space<vmem>>, vector<16x64xf32>
      tpu.vector_store %arg6[%c0_16, %c0_17], %21 {strides = array<i32>} : memref<16x64xf32, #tpu.memory_space<vmem>>, vector<16x64xf32>,
    } else {
    }
    %c0 = arith.constant 0 : index
    %c0_1 = arith.constant 0 : index
    %3 = vector.load %arg2[%c0, %c0_1] : memref<16x64xbf16, #tpu.memory_space<vmem>>, vector<16x64xbf16>
    %c0_2 = arith.constant 0 : index
    %c0_3 = arith.constant 0 : index
    %4 = vector.load %arg3[%c0_2, %c0_3] : memref<64x128xbf16, #tpu.memory_space<vmem>>, vector<64x128xbf16>
    %cst = arith.constant dense<0.000000e+00> : vector<16x128xf32>
    %5 = tpu.matmul %3, %4, %cst {dimension_numbers = #tpu.dot_dimension_numbers<[1], [0], [0], [1], [0, 0, 1, 1], [], []>} : vector<16x64xbf16>, vector<64x128xbf16>, vector<16x128xf32> -> vector<16x128xf32>
    %c0_4 = arith.constant 0 : index
    %c0_5 = arith.constant 0 : index
    %6 = vector.load %arg4[%c0_4, %c0_5] : memref<64x128xbf16, #tpu.memory_space<vmem>>, vector<64x128xbf16>
    %cst_6 = arith.constant dense<0.000000e+00> : vector<16x128xf32>
    %7 = tpu.matmul %3, %6, %cst_6 {dimension_numbers = #tpu.dot_dimension_numbers<[1], [0], [0], [1], [0, 0, 1, 1], [], []>} : vector<16x64xbf16>, vector<64x128xbf16>, vector<16x128xf32> -> vector<16x128xf32>
    %8 = arith.negf %5 : vector<16x128xf32>
    %9 = math.exp %8 : vector<16x128xf32>
    %cst_7 = arith.constant 1.000000e+00 : f32
    %10 = vector.broadcast %cst_7 : f32 to vector<16x128xf32>
    %11 = arith.addf %10, %9 : vector<16x128xf32>
    %12 = arith.divf %10, %11 : vector<16x128xf32>
    %13 = arith.mulf %5, %12 : vector<16x128xf32>
    %14 = arith.mulf %13, %7 : vector<16x128xf32>
    %c0_8 = arith.constant 0 : index
    %c0_9 = arith.constant 0 : index
    %15 = vector.load %arg6[%c0_8, %c0_9] : memref<16x64xf32, #tpu.memory_space<vmem>>, vector<16x64xf32>
    %16 = arith.truncf %14 : vector<16x128xf32> to vector<16x128xbf16>
    %c0_10 = arith.constant 0 : index
    %c0_11 = arith.constant 0 : index
    %17 = vector.load %arg5[%c0_10, %c0_11] : memref<128x64xbf16, #tpu.memory_space<vmem>>, vector<128x64xbf16>
    %cst_12 = arith.constant dense<0.000000e+00> : vector<16x64xf32>
    %18 = tpu.matmul %16, %17, %cst_12 {dimension_numbers = #tpu.dot_dimension_numbers<[1], [0], [0], [1], [0, 0, 1, 1], [], []>} : vector<16x128xbf16>, vector<128x64xbf16>, vector<16x64xf32> -> vector<16x64xf32>
    %19 = arith.addf %15, %18 : vector<16x64xf32>
    %c0_13 = arith.constant 0 : index
    %c0_14 = arith.constant 0 : index
    %20 = vector.load %arg6[%c0_13, %c0_14] : memref<16x64xf32, #tpu.memory_space<vmem>>, vector<16x64xf32>
    tpu.vector_store %arg6[%c0_13, %c0_14], %19 {strides = array<i32>} : memref<16x64xf32, #tpu.memory_space<vmem>>, vector<16x64xf32>,
    return
  }
  func.func @transform_0(%arg0: i32, %arg1: i32) -> (i32, i32) {
    %c0_i32 = arith.constant 0 : i32
    %c0_i32_0 = arith.constant 0 : i32
    return %arg0, %c0_i32 : i32, i32
  }
  func.func @transform_1(%arg0: i32, %arg1: i32) -> (i32, i32) {
    %c0_i32 = arith.constant 0 : i32
    %c0_i32_0 = arith.constant 0 : i32
    return %c0_i32, %arg1 : i32, i32
  }
  func.func @transform_2(%arg0: i32, %arg1: i32) -> (i32, i32) {
    %c0_i32 = arith.constant 0 : i32
    %c0_i32_0 = arith.constant 0 : i32
    return %c0_i32, %arg1 : i32, i32
  }
  func.func @transform_3(%arg0: i32, %arg1: i32) -> (i32, i32) {
    %c0_i32 = arith.constant 0 : i32
    %c0_i32_0 = arith.constant 0 : i32
    return %arg1, %c0_i32 : i32, i32
  }
  func.func @transform_4(%arg0: i32, %arg1: i32) -> (i32, i32) {
    %c0_i32 = arith.constant 0 : i32
    %c0_i32_0 = arith.constant 0 : i32
    return %arg0, %c0_i32 : i32, i32
  }
}

</mosaic_0001>

<llo_original>
// kernel: tpu_custom_call.1
$region0: #{tpu_custom_call.1}
  #allocation0 [shape = 'u32[]', space=smem, size = 0x4, offset = 0x4, fixed_abs, tag = 'smem constant byte address 0x4 - core index']
  #allocation1 [shape = 'u32[144,128]{1,0:T(1,128)}', space=vmem, size = 0x12000, scoped, tag = 'internal scratch']
  %s0 = inlined_call_operand.vmem [shape: bf16[32,64], index: 0, kind: input, shape index: {}]
  %s1 = inlined_call_operand.vmem [shape: bf16[64,256], index: 1, kind: input, shape index: {}]
  %s2 = inlined_call_operand.vmem [shape: bf16[64,256], index: 2, kind: input, shape index: {}]
  %s3 = inlined_call_operand.vmem [shape: bf16[256,64], index: 3, kind: input, shape index: {}]
  %s4 = inlined_call_operand.hbm [shape: f32[32,64], index: 4, kind: output, shape index: {}]
  %s5 = sld [smem:[#allocation0]]
  $region135: #{tpu_custom_call.1} parent=0
    _
  %s7 = ssub.s32 1, %s5
  %s8 = scalar_select 0, %s7, %s5
  $region1: #{tpu_custom_call.1} parent=0
    #allocation2 [shape = 'u8[32768]{0}', space=vmem, size = 0x8000, scoped, tag = 'input window, operand 1']
    #allocation3 [shape = 'u8[32768]{0}', space=vmem, size = 0x8000, scoped, tag = 'input window, operand 2']
    #allocation4 [shape = 'u8[16384]{0}', space=vmem, size = 0x4000, scoped, tag = 'output window, operand 0']
    #allocation5 [shape = 's32[2]{0}', space=sflag, size = 0x8, scoped, tag = 'scoped memory for tpu_custom_call.1']
    %9 = vsyncpa [#allocation5], 0
    %s10 = scalar_lea.sflag [#allocation5], 1
    %11 = vsyncpa %s10, 0
    loop: start=0, step=1, limit=6
    $region2: #{tpu_custom_call.1} parent=1 // loop_pre_header
      _
    $region3: #{tpu_custom_call.1} parent=1 // loop_header
      %s13 = sphi 0, %s17
      %p14 = scmp.ge.s32.totalorder %s13, 6
      %s20 = sphi 0, %s32
      %s21 = sphi 0, %s28
      %s22 = sphi 0, %s20
      %s23 = sphi 0, %s21
      %s24 = sphi 0, %s22
      %s25 = sphi 0, %s23
      %s35 = sphi 0, %s37
      %s38 = sphi 0, %s35
      %s39 = sphi 0, %s38
      %s55 = sphi 0, %s39
      %s61 = sphi 0, %s63
      %s64 = sphi 0, %s61
      %s65 = sphi 0, %s64
      %s81 = sphi 0, %s65
      %s87 = sphi 0, %s89
      %s90 = sphi 0, %s87
      %s91 = sphi 0, %s90
      %s107 = sphi 0, %s91
      %s113 = sphi 0, %s115
      %s116 = sphi 0, %s113
      %s117 = sphi 0, %s116
      %s133 = sphi 0, %s117
      %s139 = sphi 0, %s141
      %s142 = sphi 0, %s139
      %s143 = sphi 0, %s142
      %s159 = sphi 0, %s143
    $region4: #{tpu_custom_call.1} parent=1 // loop_header_branch
      %16 = sbr.rel (%p14) target = $region8
    $region5: #{tpu_custom_call.1} parent=1 // loop_body
      %s18 = ssub.s32 %s13, 1
      %s19 = ssub.s32 %s13, 2
      %s26 = sadd.s32 1, %s21
      %p27 = scmp.ge.s32.totalorder %s26, 2
      %s28 = scalar_select %p27, 0, %s26
      %s29 = sadd.s32 1, %s20
      %s30 = scalar_select %p27, %s29, %s20
      %p31 = scmp.ge.s32.totalorder %s30, 2
      %s32 = scalar_select %p31, 0, %s30
      %s33 = ssub.s32 %s20, %s32
      %p34 = scmp.eq.s32.totalorder %s33, 0
      %s36 = sadd.s32 %s35, 1
      %s37 = scalar_select %p34, %s35, %s36
      %p40 = pneg %p34
      %p41 = scmp.eq.s32.totalorder %s13, 3
      %p42 = por %p40, %p41
      %p43 = scmp.ne.s32.totalorder %s35, %s38
      %p44 = scmp.eq.s32.totalorder %s13, 0
      %p45 = por %p43, %p44
      %p46 = scmp.ne.s32.totalorder %s35, %s38
      %p47 = scmp.eq.s32.totalorder %s18, 3
      %p48 = por %p46, %p47
      %p49 = scmp.ne.s32.totalorder %s38, %s39
      %p50 = scmp.eq.s32.totalorder %s18, 0
      %p51 = por %p49, %p50
      %p52 = scmp.ne.s32.totalorder %s38, %s39
      %p53 = scmp.eq.s32.totalorder %s19, 3
      %p54 = por %p52, %p53
      %p56 = scmp.ne.s32.totalorder %s39, %s55
      %p57 = scmp.eq.s32.totalorder %s19, 0
      %p58 = por %p56, %p57
      %s59 = ssub.s32 %s21, %s28
      %p60 = scmp.eq.s32.totalorder %s59, 0
      %s62 = sadd.s32 %s61, 1
      %s63 = scalar_select %p60, %s61, %s62
      %p66 = pneg %p60
      %p67 = scmp.eq.s32.totalorder %s13, 3
      %p68 = por %p66, %p67
      %p69 = scmp.ne.s32.totalorder %s61, %s64
      %p70 = scmp.eq.s32.totalorder %s13, 0
      %p71 = por %p69, %p70
      %p72 = scmp.ne.s32.totalorder %s61, %s64
      %p73 = scmp.eq.s32.totalorder %s18, 3
      %p74 = por %p72, %p73
      %p75 = scmp.ne.s32.totalorder %s64, %s65
      %p76 = scmp.eq.s32.totalorder %s18, 0
      %p77 = por %p75, %p76
      %p78 = scmp.ne.s32.totalorder %s64, %s65
      %p79 = scmp.eq.s32.totalorder %s19, 3
      %p80 = por %p78, %p79
      %p82 = scmp.ne.s32.totalorder %s65, %s81
      %p83 = scmp.eq.s32.totalorder %s19, 0
      %p84 = por %p82, %p83
      %s85 = ssub.s32 %s21, %s28
      %p86 = scmp.eq.s32.totalorder %s85, 0
      %s88 = sadd.s32 %s87, 1
      %s89 = scalar_select %p86, %s87, %s88
      %p92 = pneg %p86
      %p93 = scmp.eq.s32.totalorder %s13, 3
      %p94 = por %p92, %p93
      %p95 = scmp.ne.s32.totalorder %s87, %s90
      %p96 = scmp.eq.s32.totalorder %s13, 0
      %p97 = por %p95, %p96
      %p98 = scmp.ne.s32.totalorder %s87, %s90
      %p99 = scmp.eq.s32.totalorder %s18, 3
      %p100 = por %p98, %p99
      %p101 = scmp.ne.s32.totalorder %s90, %s91
      %p102 = scmp.eq.s32.totalorder %s18, 0
      %p103 = por %p101, %p102
      %p104 = scmp.ne.s32.totalorder %s90, %s91
      %p105 = scmp.eq.s32.totalorder %s19, 3
      %p106 = por %p104, %p105
      %p108 = scmp.ne.s32.totalorder %s91, %s107
      %p109 = scmp.eq.s32.totalorder %s19, 0
      %p110 = por %p108, %p109
      %s111 = ssub.s32 %s21, %s28
      %p112 = scmp.eq.s32.totalorder %s111, 0
      %s114 = sadd.s32 %s113, 1
      %s115 = scalar_select %p112, %s113, %s114
      %p118 = pneg %p112
      %p119 = scmp.eq.s32.totalorder %s13, 3
      %p120 = por %p118, %p119
      %p121 = scmp.ne.s32.totalorder %s113, %s116
      %p122 = scmp.eq.s32.totalorder %s13, 0
      %p123 = por %p121, %p122
      %p124 = scmp.ne.s32.totalorder %s113, %s116
      %p125 = scmp.eq.s32.totalorder %s18, 3
      %p126 = por %p124, %p125
      %p127 = scmp.ne.s32.totalorder %s116, %s117
      %p128 = scmp.eq.s32.totalorder %s18, 0
      %p129 = por %p127, %p128
      %p130 = scmp.ne.s32.totalorder %s116, %s117
      %p131 = scmp.eq.s32.totalorder %s19, 3
      %p132 = por %p130, %p131
      %p134 = scmp.ne.s32.totalorder %s117, %s133
      %p135 = scmp.eq.s32.totalorder %s19, 0
      %p136 = por %p134, %p135
      %s137 = ssub.s32 %s20, %s32
      %p138 = scmp.eq.s32.totalorder %s137, 0
      %s140 = sadd.s32 %s139, 1
      %s141 = scalar_select %p138, %s139, %s140
      %p144 = pneg %p138
      %p145 = scmp.eq.s32.totalorder %s13, 3
      %p146 = por %p144, %p145
      %p147 = scmp.ne.s32.totalorder %s139, %s142
      %p148 = scmp.eq.s32.totalorder %s13, 0
      %p149 = por %p147, %p148
      %p150 = scmp.ne.s32.totalorder %s139, %s142
      %p151 = scmp.eq.s32.totalorder %s18, 3
      %p152 = por %p150, %p151
      %p153 = scmp.ne.s32.totalorder %s142, %s143
      %p154 = scmp.eq.s32.totalorder %s18, 0
      %p155 = por %p153, %p154
      %p156 = scmp.ne.s32.totalorder %s142, %s143
      %p157 = scmp.eq.s32.totalorder %s19, 3
      %p158 = por %p156, %p157
      %p160 = scmp.ne.s32.totalorder %s143, %s159
      %p161 = scmp.eq.s32.totalorder %s19, 0
      %p162 = por %p160, %p161
      %p163 = scmp.le.s32.totalorder 1, %s13
      %p164 = scmp.lt.s32.totalorder %s13, 5
      %p165 = pnand %p163, %p164
      %p166 = pneg %p165
      // Predicated region
      $region9: #{tpu_custom_call.1} parent=5 // pred_check
        _
      $region10: #{tpu_custom_call.1} parent=5 // pred_check_branch
        %168 = sbr.rel (%p165) target = $region12
      $region11: #{tpu_custom_call.1} parent=5 // pred_region
        %s169 = ssub.s32 %s13, 1
      $region12: #{tpu_custom_call.1} parent=5 // pred_fallthru
        _
      %p170 = scmp.lt.s32.totalorder %s13, 4
      // Predicated region
      $region13: #{tpu_custom_call.1} parent=5 // pred_check
        %p171 = pneg %p170
      $region14: #{tpu_custom_call.1} parent=5 // pred_check_branch
        %173 = sbr.rel (%p171) target = $region16
      $region15: #{tpu_custom_call.1} parent=5 // pred_region
        // Predicated region
        $region17: #{tpu_custom_call.1} parent=15 // pred_check
          %p174 = pneg %p45
        $region18: #{tpu_custom_call.1} parent=15 // pred_check_branch
          %176 = sbr.rel (%p174) target = $region20
        $region19: #{tpu_custom_call.1} parent=15 // pred_region
          %s177 = smul.u32 2, %s20
          %p178 = scmp.lt.s32.totalorder %s177, 3
          %s179 = scalar_select %p178, %s177, 3
          %s180 = smul.addr %s179, 4
          %s181 = scalar_lea.vmem %s0, %s180
          %s182 = smul.u32 2, %s20
        $region20: #{tpu_custom_call.1} parent=15 // pred_fallthru
          _
        // Predicated region
        $region21: #{tpu_custom_call.1} parent=15 // pred_check
          %p183 = pneg %p71
        $region22: #{tpu_custom_call.1} parent=15 // pred_check_branch
          %185 = sbr.rel (%p183) target = $region24
        $region23: #{tpu_custom_call.1} parent=15 // pred_region
          %s186 = sand.u32 %s61, 1
          %s187 = sand.u32 %s61, 1
          %s188 = smul.addr %s187, 32
          %s189 = scalar_lea.vmem [#allocation2], %s188
          %s190 = smul.addr %s21, 4
          %s191 = scalar_lea.vmem %s1, %s190
          // Predicated region
          $region25: #{tpu_custom_call.1} parent=23 // pred_check
            _
          $region26: #{tpu_custom_call.1} parent=23 // pred_check_branch
            %193 = sbr.rel (0) target = $region28
          $region27: #{tpu_custom_call.1} parent=23 // pred_region
            // Predicated region
            $region29: #{tpu_custom_call.1} parent=27 // pred_check
              _
            $region30: #{tpu_custom_call.1} parent=27 // pred_check_branch
              %195 = sbr.rel target = $region32
            $region31: #{tpu_custom_call.1} parent=27 // pred_region
              // Predicated region
              $region44: #{tpu_custom_call.1} parent=31 // pred_check
                _
              $region45: #{tpu_custom_call.1} parent=31 // pred_check_branch
                %224 = sbr.rel (0) target = $region47
              $region46: #{tpu_custom_call.1} parent=31 // pred_region
                loop: start=0, step=1, limit=1
                $region48: #{tpu_custom_call.1} parent=46 // loop_pre_header
                  _
                $region49: #{tpu_custom_call.1} parent=46 // loop_header
                  %s226 = sphi 0, %s230
                  %p227 = scmp.ge.s32.totalorder %s226, 1
                  %s231 = sphi %s191, %s191
                  %s232 = sphi %s189, %s189
                $region50: #{tpu_custom_call.1} parent=46 // loop_header_branch
                  %229 = sbr.rel (%p227) target = $region54
                $region51: #{tpu_custom_call.1} parent=46 // loop_body
                  _
                $region52: #{tpu_custom_call.1} parent=46 // loop_footer
                  %s230 = sadd.s32 1, %s226
                $region53: #{tpu_custom_call.1} parent=46 // loop_footer_branch
                  %225 = sbr.rel target = $region49
                $region54: #{tpu_custom_call.1} parent=46 // loop_exit
                  _
                loop: start=0, step=1, limit=1
                $region55: #{tpu_custom_call.1} parent=46 // loop_pre_header
                  _
                $region56: #{tpu_custom_call.1} parent=46 // loop_header
                  %s235 = sphi 0, %s239
                  %p236 = scmp.ge.s32.totalorder %s235, 1
                  %s240 = sphi %s191, %s191
                  %s241 = sphi %s189, %s189
                $region57: #{tpu_custom_call.1} parent=46 // loop_header_branch
                  %238 = sbr.rel (%p236) target = $region61
                $region58: #{tpu_custom_call.1} parent=46 // loop_body
                  %v242 = vld [vmem:[%s240] sm:$0xf]
                  %243 = vst [vmem:[%s241] sm:$0xf] %v242
                  %v244 = vld [vmem:[%s240 + $0x8] sm:$0xf]
                  %245 = vst [vmem:[%s241 + $0x4] sm:$0xf] %v244
                  %v246 = vld [vmem:[%s240 + $0x10] sm:$0xf]
                  %247 = vst [vmem:[%s241 + $0x8] sm:$0xf] %v246
                  %v248 = vld [vmem:[%s240 + $0x18] sm:$0xf]
                  %249 = vst [vmem:[%s241 + $0xc] sm:$0xf] %v248
                  %v250 = vld [vmem:[%s240 + $0x20] sm:$0xf]
                  %251 = vst [vmem:[%s241 + $0x10] sm:$0xf] %v250
                  %v252 = vld [vmem:[%s240 + $0x28] sm:$0xf]
                  %253 = vst [vmem:[%s241 + $0x14] sm:$0xf] %v252
                  %v254 = vld [vmem:[%s240 + $0x30] sm:$0xf]
                  %255 = vst [vmem:[%s241 + $0x18] sm:$0xf] %v254
                  %v256 = vld [vmem:[%s240 + $0x38] sm:$0xf]
                  %257 = vst [vmem:[%s241 + $0x1c] sm:$0xf] %v256
                $region59: #{tpu_custom_call.1} parent=46 // loop_footer
                  %s239 = sadd.s32 1, %s235
                $region60: #{tpu_custom_call.1} parent=46 // loop_footer_branch
                  %234 = sbr.rel target = $region56
                $region61: #{tpu_custom_call.1} parent=46 // loop_exit
                  _
              $region47: #{tpu_custom_call.1} parent=31 // pred_fallthru
                _
            $region32: #{tpu_custom_call.1} parent=27 // pred_fallthru
              _
            // Predicated region
            $region33: #{tpu_custom_call.1} parent=27 // pred_check
              _
            $region34: #{tpu_custom_call.1} parent=27 // pred_check_branch
              %197 = sbr.rel (0) target = $region36
            $region35: #{tpu_custom_call.1} parent=27 // pred_region
              loop: start=0, step=1, limit=1
              $region37: #{tpu_custom_call.1} parent=35 // loop_pre_header
                _
              $region38: #{tpu_custom_call.1} parent=35 // loop_header
                %s200 = sphi 0, %s204
                %p201 = scmp.ge.s32.totalorder %s200, 1
                %s205 = sphi %s191, %s191
                %s206 = sphi %s189, %s189
              $region39: #{tpu_custom_call.1} parent=35 // loop_header_branch
                %203 = sbr.rel (%p201) target = $region43
              $region40: #{tpu_custom_call.1} parent=35 // loop_body
                %v207 = vld [vmem:[%s205] sm:$0xf]
                %208 = vst [vmem:[%s206] sm:$0xf] %v207
                %v209 = vld [vmem:[%s205 + $0x8] sm:$0xf]
                %210 = vst [vmem:[%s206 + $0x4] sm:$0xf] %v209
                %v211 = vld [vmem:[%s205 + $0x10] sm:$0xf]
                %212 = vst [vmem:[%s206 + $0x8] sm:$0xf] %v211
                %v213 = vld [vmem:[%s205 + $0x18] sm:$0xf]
                %214 = vst [vmem:[%s206 + $0xc] sm:$0xf] %v213
                %v215 = vld [vmem:[%s205 + $0x20] sm:$0xf]
                %216 = vst [vmem:[%s206 + $0x10] sm:$0xf] %v215
                %v217 = vld [vmem:[%s205 + $0x28] sm:$0xf]
                %218 = vst [vmem:[%s206 + $0x14] sm:$0xf] %v217
                %v219 = vld [vmem:[%s205 + $0x30] sm:$0xf]
                %220 = vst [vmem:[%s206 + $0x18] sm:$0xf] %v219
                %v221 = vld [vmem:[%s205 + $0x38] sm:$0xf]
                %222 = vst [vmem:[%s206 + $0x1c] sm:$0xf] %v221
              $region41: #{tpu_custom_call.1} parent=35 // loop_footer
                %s204 = sadd.s32 1, %s200
              $region42: #{tpu_custom_call.1} parent=35 // loop_footer_branch
                %199 = sbr.rel target = $region38
              $region43: #{tpu_custom_call.1} parent=35 // loop_exit
                _
            $region36: #{tpu_custom_call.1} parent=27 // pred_fallthru
              _
          $region28: #{tpu_custom_call.1} parent=23 // pred_fallthru
            _
          %258 = vnop
        $region24: #{tpu_custom_call.1} parent=15 // pred_fallthru
          _
        // Predicated region
        $region62: #{tpu_custom_call.1} parent=15 // pred_check
          %p259 = pneg %p97
        $region63: #{tpu_custom_call.1} parent=15 // pred_check_branch
          %261 = sbr.rel (%p259) target = $region65
        $region64: #{tpu_custom_call.1} parent=15 // pred_region
          %s262 = sand.u32 %s87, 1
          %s263 = sand.u32 %s87, 1
          %s264 = smul.addr %s263, 32
          %s265 = scalar_lea.vmem [#allocation3], %s264
          %s266 = smul.addr %s21, 4
          %s267 = scalar_lea.vmem %s2, %s266
          // Predicated region
          $region66: #{tpu_custom_call.1} parent=64 // pred_check
            _
          $region67: #{tpu_custom_call.1} parent=64 // pred_check_branch
            %269 = sbr.rel (0) target = $region69
          $region68: #{tpu_custom_call.1} parent=64 // pred_region
            // Predicated region
            $region70: #{tpu_custom_call.1} parent=68 // pred_check
              _
            $region71: #{tpu_custom_call.1} parent=68 // pred_check_branch
              %271 = sbr.rel target = $region73
            $region72: #{tpu_custom_call.1} parent=68 // pred_region
              // Predicated region
              $region85: #{tpu_custom_call.1} parent=72 // pred_check
                _
              $region86: #{tpu_custom_call.1} parent=72 // pred_check_branch
                %300 = sbr.rel (0) target = $region88
              $region87: #{tpu_custom_call.1} parent=72 // pred_region
                loop: start=0, step=1, limit=1
                $region89: #{tpu_custom_call.1} parent=87 // loop_pre_header
                  _
                $region90: #{tpu_custom_call.1} parent=87 // loop_header
                  %s302 = sphi 0, %s306
                  %p303 = scmp.ge.s32.totalorder %s302, 1
                  %s307 = sphi %s267, %s267
                  %s308 = sphi %s265, %s265
                $region91: #{tpu_custom_call.1} parent=87 // loop_header_branch
                  %305 = sbr.rel (%p303) target = $region95
                $region92: #{tpu_custom_call.1} parent=87 // loop_body
                  _
                $region93: #{tpu_custom_call.1} parent=87 // loop_footer
                  %s306 = sadd.s32 1, %s302
                $region94: #{tpu_custom_call.1} parent=87 // loop_footer_branch
                  %301 = sbr.rel target = $region90
                $region95: #{tpu_custom_call.1} parent=87 // loop_exit
                  _
                loop: start=0, step=1, limit=1
                $region96: #{tpu_custom_call.1} parent=87 // loop_pre_header
                  _
                $region97: #{tpu_custom_call.1} parent=87 // loop_header
                  %s311 = sphi 0, %s315
                  %p312 = scmp.ge.s32.totalorder %s311, 1
                  %s316 = sphi %s267, %s267
                  %s317 = sphi %s265, %s265
                $region98: #{tpu_custom_call.1} parent=87 // loop_header_branch
                  %314 = sbr.rel (%p312) target = $region102
                $region99: #{tpu_custom_call.1} parent=87 // loop_body
                  %v318 = vld [vmem:[%s316] sm:$0xf]
                  %319 = vst [vmem:[%s317] sm:$0xf] %v318
                  %v320 = vld [vmem:[%s316 + $0x8] sm:$0xf]
                  %321 = vst [vmem:[%s317 + $0x4] sm:$0xf] %v320
                  %v322 = vld [vmem:[%s316 + $0x10] sm:$0xf]
                  %323 = vst [vmem:[%s317 + $0x8] sm:$0xf] %v322
                  %v324 = vld [vmem:[%s316 + $0x18] sm:$0xf]
                  %325 = vst [vmem:[%s317 + $0xc] sm:$0xf] %v324
                  %v326 = vld [vmem:[%s316 + $0x20] sm:$0xf]
                  %327 = vst [vmem:[%s317 + $0x10] sm:$0xf] %v326
                  %v328 = vld [vmem:[%s316 + $0x28] sm:$0xf]
                  %329 = vst [vmem:[%s317 + $0x14] sm:$0xf] %v328
                  %v330 = vld [vmem:[%s316 + $0x30] sm:$0xf]
                  %331 = vst [vmem:[%s317 + $0x18] sm:$0xf] %v330
                  %v332 = vld [vmem:[%s316 + $0x38] sm:$0xf]
                  %333 = vst [vmem:[%s317 + $0x1c] sm:$0xf] %v332
                $region100: #{tpu_custom_call.1} parent=87 // loop_footer
                  %s315 = sadd.s32 1, %s311
                $region101: #{tpu_custom_call.1} parent=87 // loop_footer_branch
                  %310 = sbr.rel target = $region97
                $region102: #{tpu_custom_call.1} parent=87 // loop_exit
                  _
              $region88: #{tpu_custom_call.1} parent=72 // pred_fallthru
                _
            $region73: #{tpu_custom_call.1} parent=68 // pred_fallthru
              _
            // Predicated region
            $region74: #{tpu_custom_call.1} parent=68 // pred_check
              _
            $region75: #{tpu_custom_call.1} parent=68 // pred_check_branch
              %273 = sbr.rel (0) target = $region77
            $region76: #{tpu_custom_call.1} parent=68 // pred_region
              loop: start=0, step=1, limit=1
              $region78: #{tpu_custom_call.1} parent=76 // loop_pre_header
                _
              $region79: #{tpu_custom_call.1} parent=76 // loop_header
                %s276 = sphi 0, %s280
                %p277 = scmp.ge.s32.totalorder %s276, 1
                %s281 = sphi %s267, %s267
                %s282 = sphi %s265, %s265
              $region80: #{tpu_custom_call.1} parent=76 // loop_header_branch
                %279 = sbr.rel (%p277) target = $region84
              $region81: #{tpu_custom_call.1} parent=76 // loop_body
                %v283 = vld [vmem:[%s281] sm:$0xf]
                %284 = vst [vmem:[%s282] sm:$0xf] %v283
                %v285 = vld [vmem:[%s281 + $0x8] sm:$0xf]
                %286 = vst [vmem:[%s282 + $0x4] sm:$0xf] %v285
                %v287 = vld [vmem:[%s281 + $0x10] sm:$0xf]
                %288 = vst [vmem:[%s282 + $0x8] sm:$0xf] %v287
                %v289 = vld [vmem:[%s281 + $0x18] sm:$0xf]
                %290 = vst [vmem:[%s282 + $0xc] sm:$0xf] %v289
                %v291 = vld [vmem:[%s281 + $0x20] sm:$0xf]
                %292 = vst [vmem:[%s282 + $0x10] sm:$0xf] %v291
                %v293 = vld [vmem:[%s281 + $0x28] sm:$0xf]
                %294 = vst [vmem:[%s282 + $0x14] sm:$0xf] %v293
                %v295 = vld [vmem:[%s281 + $0x30] sm:$0xf]
                %296 = vst [vmem:[%s282 + $0x18] sm:$0xf] %v295
                %v297 = vld [vmem:[%s281 + $0x38] sm:$0xf]
                %298 = vst [vmem:[%s282 + $0x1c] sm:$0xf] %v297
              $region82: #{tpu_custom_call.1} parent=76 // loop_footer
                %s280 = sadd.s32 1, %s276
              $region83: #{tpu_custom_call.1} parent=76 // loop_footer_branch
                %275 = sbr.rel target = $region79
              $region84: #{tpu_custom_call.1} parent=76 // loop_exit
                _
            $region77: #{tpu_custom_call.1} parent=68 // pred_fallthru
              _
          $region69: #{tpu_custom_call.1} parent=64 // pred_fallthru
            _
          %334 = vnop
        $region65: #{tpu_custom_call.1} parent=15 // pred_fallthru
          _
        // Predicated region
        $region103: #{tpu_custom_call.1} parent=15 // pred_check
          %p335 = pneg %p123
        $region104: #{tpu_custom_call.1} parent=15 // pred_check_branch
          %337 = sbr.rel (%p335) target = $region106
        $region105: #{tpu_custom_call.1} parent=15 // pred_region
          %s338 = smul.u32 16, %s21
          %p339 = scmp.lt.s32.totalorder %s338, 31
          %s340 = scalar_select %p339, %s338, 31
          %s341 = smul.addr %s340, 4
          %s342 = scalar_lea.vmem %s3, %s341
          %s343 = smul.u32 16, %s21
        $region106: #{tpu_custom_call.1} parent=15 // pred_fallthru
          _
      $region16: #{tpu_custom_call.1} parent=5 // pred_fallthru
        _
      %p344 = scmp.le.s32.totalorder 1, %s13
      %p345 = scmp.lt.s32.totalorder %s13, 5
      %p346 = pnand %p344, %p345
      %p347 = pneg %p346
      // Predicated region
      $region107: #{tpu_custom_call.1} parent=5 // pred_check
        _
      $region108: #{tpu_custom_call.1} parent=5 // pred_check_branch
        %349 = sbr.rel (%p346) target = $region110
      $region109: #{tpu_custom_call.1} parent=5 // pred_region
        %s350 = ssub.s32 %s13, 1
        %s351 = sand.u32 %s64, 1
        %s352 = sand.u32 %s64, 1
        %s353 = smul.addr %s352, 32
        %s354 = scalar_lea.vmem [#allocation2], %s353
        // Predicated region
        $region111: #{tpu_custom_call.1} parent=109 // pred_check
          %p355 = pneg %p77
        $region112: #{tpu_custom_call.1} parent=109 // pred_check_branch
          %357 = sbr.rel (%p355) target = $region114
        $region113: #{tpu_custom_call.1} parent=109 // pred_region
          _
        $region114: #{tpu_custom_call.1} parent=109 // pred_fallthru
          _
        %s358 = sand.u32 %s90, 1
        %s359 = sand.u32 %s90, 1
        %s360 = smul.addr %s359, 32
        %s361 = scalar_lea.vmem [#allocation3], %s360
        // Predicated region
        $region115: #{tpu_custom_call.1} parent=109 // pred_check
          %p362 = pneg %p103
        $region116: #{tpu_custom_call.1} parent=109 // pred_check_branch
          %364 = sbr.rel (%p362) target = $region118
        $region117: #{tpu_custom_call.1} parent=109 // pred_region
          _
        $region118: #{tpu_custom_call.1} parent=109 // pred_fallthru
          _
        %s365 = smul.u32 2, %s22
        %p366 = scmp.lt.s32.totalorder %s365, 3
        %s367 = scalar_select %p366, %s365, 3
        %s368 = smul.addr %s367, 4
        %s369 = scalar_lea.vmem %s0, %s368
        %p370 = pneg %p51
        %p371 = pneg %p48
        %s372 = sand.u32 %s64, 1
        %s373 = sand.u32 %s64, 1
        %s374 = smul.addr %s373, 32
        %s375 = scalar_lea.vmem [#allocation2], %s374
        %p376 = pneg %p77
        %p377 = pneg %p74
        %s378 = sand.u32 %s90, 1
        %s379 = sand.u32 %s90, 1
        %s380 = smul.addr %s379, 32
        %s381 = scalar_lea.vmem [#allocation3], %s380
        %p382 = pneg %p103
        %p383 = pneg %p100
        %s384 = smul.u32 16, %s23
        %p385 = scmp.lt.s32.totalorder %s384, 31
        %s386 = scalar_select %p385, %s384, 31
        %s387 = smul.addr %s386, 4
        %s388 = scalar_lea.vmem %s3, %s387
        %p389 = pneg %p129
        %p390 = pneg %p126
        %p391 = pneg %p155
        %p392 = pneg %p152
        %s393 = sand.u32 %s142, 1
        %s394 = scalar_lea.sflag [#allocation5], %s393
        %s395 = sand.u32 %s142, 1
        %s396 = smul.addr %s395, 16
        %s397 = scalar_lea.vmem [#allocation4], %s396
        %s398 = smul.u32 2, %s22
        %p399 = scmp.lt.s32.totalorder %s398, 3
        %s400 = scalar_select %p399, %s398, 3
        %s401 = smul.addr %s400, 4
        %s402 = scalar_lea.vmem %s0, %s401
        %s403 = smul.u32 2, %s22
        %s404 = smul.u32 16, %s23
        %p405 = scmp.lt.s32.totalorder %s404, 31
        %s406 = scalar_select %p405, %s404, 31
        %s407 = smul.addr %s406, 4
        %s408 = scalar_lea.vmem %s3, %s407
        %s409 = smul.u32 16, %s23
        %s410 = smul.u32 2, %s22
        %p412 = scmp.eq.s32.totalorder %s23, 0
        // Predicated region
        $region119: #{tpu_custom_call.1} parent=109 // pred_check
          %p413 = pneg %p412
        $region120: #{tpu_custom_call.1} parent=109 // pred_check_branch
          %415 = sbr.rel (%p413) target = $region122
        $region121: #{tpu_custom_call.1} parent=109 // pred_region
          %vm416 = vcmask 523264
          %417 = vst.msk [vmem:[%s397] sm:$0xff] %vm416, 0.0
          %418 = vst.msk [vmem:[%s397 + $0x8] sm:$0xff] %vm416, 0.0
        $region122: #{tpu_custom_call.1} parent=109 // pred_fallthru
          _
        %v419 = vld [vmem:[%s402] sm:$0xf]
        %v420 = vld [vmem:[%s402 + $0x4] sm:$0xf]
        %v421 = vld [vmem:[%s354] sm:$0xf]
        %v422 = vld [vmem:[%s354 + $0x4] sm:$0xf]
        %v423 = vld [vmem:[%s354 + $0x8] sm:$0xf]
        %v424 = vld [vmem:[%s354 + $0xc] sm:$0xf]
        %v425 = vld [vmem:[%s354 + $0x10] sm:$0xf]
        %v426 = vld [vmem:[%s354 + $0x14] sm:$0xf]
        %v427 = vld [vmem:[%s354 + $0x18] sm:$0xf]
        %v428 = vld [vmem:[%s354 + $0x1c] sm:$0xf]
        %v431 = vunpack.c.l.b16 %v419
        %v432 = vunpack.c.l.b16 %v420
        %v433 = vpack.c.b16 %v432, %v431
        %v442 = vunpack.c.l.b16 %v421
        %v443 = vunpack.c.l.b16 %v422
        %v444 = vunpack.c.l.b16 %v423
        %v445 = vunpack.c.l.b16 %v424
        %v446 = vunpack.c.l.b16 %v425
        %v447 = vunpack.c.l.b16 %v426
        %v448 = vunpack.c.l.b16 %v427
        %v449 = vunpack.c.l.b16 %v428
        %v450 = vpack.c.b16 %v443, %v442
        %v451 = vpack.c.b16 %v445, %v444
        %v452 = vpack.c.b16 %v447, %v446
        %v453 = vpack.c.b16 %v449, %v448
        %vm458 = vcmask 523264
        %v460 = vsel %vm458, %v433, 0
        %462 = vmatprep.subr.bf16.mxu0 0
        %463 = vmatpush1.bf16.msra.mxu0 %v450
        %464 = vmatprep.subr.bf16.mxu0 0
        %465 = vmatpush1.bf16.msra.mxu0 %v451
        %466 = vmatprep.subr.bf16.mxu0 0
        %467 = vmatpush1.bf16.msra.mxu0 %v452
        %468 = vmatprep.subr.bf16.mxu0 0
        %469 = vmatpush1.bf16.msra.mxu0 %v453
        %470 = vmatprep.subr.bf16.mxu0 0
        %471 = vmatpush1.bf16.msra.mxu0 0
        %472 = vmatprep.subr.bf16.mxu0 0
        %473 = vmatpush1.bf16.msra.mxu0 0
        %474 = vmatprep.subr.bf16.mxu0 0
        %475 = vmatpush1.bf16.msra.mxu0 0
        %476 = vmatprep.subr.bf16.mxu0 0
        %477 = vmatpush1.bf16.msra.mxu0 0
        %478 = vmatprep.subr.bf16.mxu0 0
        %479 = vmatpush1.bf16.msra.mxu0 0
        %480 = vmatprep.subr.bf16.mxu0 0
        %481 = vmatpush1.bf16.msra.mxu0 0
        %482 = vmatprep.subr.bf16.mxu0 0
        %483 = vmatpush1.bf16.msra.mxu0 0
        %484 = vmatprep.subr.bf16.mxu0 0
        %485 = vmatpush1.bf16.msra.mxu0 0
        %486 = vmatprep.subr.bf16.mxu0 0
        %487 = vmatpush1.bf16.msra.mxu0 0
        %488 = vmatprep.subr.bf16.mxu0 0
        %489 = vmatpush1.bf16.msra.mxu0 0
        %490 = vmatprep.subr.bf16.mxu0 0
        %491 = vmatpush1.bf16.msra.mxu0 0
        %492 = vmatprep.subr.bf16.mxu0 0
        %493 = vmatpush1.bf16.msra.mxu0 0
        %494 = vmatprep.mubr.bf16.mxu0 0
        %495 = vmatmul.mubr.bf16.gmra.mrb[0].mxu0 %v460
        %v496 = vpop.f32.mrb[0].mxu0
        %v497 = vadd.f32 0.0, %v496
        %v498 = vpop.f32.mrb[0].mxu0
        %v499 = vpop.f32.mrb[0].mxu0
        %v500 = vadd.f32 0.0, %v499
        %v501 = vpop.f32.mrb[0].mxu0
        %502 = vdwg.mxu0
        %v503 = vld [vmem:[%s361] sm:$0xf]
        %v504 = vld [vmem:[%s361 + $0x4] sm:$0xf]
        %v505 = vld [vmem:[%s361 + $0x8] sm:$0xf]
        %v506 = vld [vmem:[%s361 + $0xc] sm:$0xf]
        %v507 = vld [vmem:[%s361 + $0x10] sm:$0xf]
        %v508 = vld [vmem:[%s361 + $0x14] sm:$0xf]
        %v509 = vld [vmem:[%s361 + $0x18] sm:$0xf]
        %v510 = vld [vmem:[%s361 + $0x1c] sm:$0xf]
        %v519 = vunpack.c.l.b16 %v503
        %v520 = vunpack.c.l.b16 %v504
        %v521 = vunpack.c.l.b16 %v505
        %v522 = vunpack.c.l.b16 %v506
        %v523 = vunpack.c.l.b16 %v507
        %v524 = vunpack.c.l.b16 %v508
        %v525 = vunpack.c.l.b16 %v509
        %v526 = vunpack.c.l.b16 %v510
        %v527 = vpack.c.b16 %v520, %v519
        %v528 = vpack.c.b16 %v522, %v521
        %v529 = vpack.c.b16 %v524, %v523
        %v530 = vpack.c.b16 %v526, %v525
        %535 = vmatprep.subr.bf16.mxu0 0
        %536 = vmatpush1.bf16.msra.mxu0 %v527
        %537 = vmatprep.subr.bf16.mxu0 0
        %538 = vmatpush1.bf16.msra.mxu0 %v528
        %539 = vmatprep.subr.bf16.mxu0 0
        %540 = vmatpush1.bf16.msra.mxu0 %v529
        %541 = vmatprep.subr.bf16.mxu0 0
        %542 = vmatpush1.bf16.msra.mxu0 %v530
        %543 = vmatprep.subr.bf16.mxu0 0
        %544 = vmatpush1.bf16.msra.mxu0 0
        %545 = vmatprep.subr.bf16.mxu0 0
        %546 = vmatpush1.bf16.msra.mxu0 0
        %547 = vmatprep.subr.bf16.mxu0 0
        %548 = vmatpush1.bf16.msra.mxu0 0
        %549 = vmatprep.subr.bf16.mxu0 0
        %550 = vmatpush1.bf16.msra.mxu0 0
        %551 = vmatprep.subr.bf16.mxu0 0
        %552 = vmatpush1.bf16.msra.mxu0 0
        %553 = vmatprep.subr.bf16.mxu0 0
        %554 = vmatpush1.bf16.msra.mxu0 0
        %555 = vmatprep.subr.bf16.mxu0 0
        %556 = vmatpush1.bf16.msra.mxu0 0
        %557 = vmatprep.subr.bf16.mxu0 0
        %558 = vmatpush1.bf16.msra.mxu0 0
        %559 = vmatprep.subr.bf16.mxu0 0
        %560 = vmatpush1.bf16.msra.mxu0 0
        %561 = vmatprep.subr.bf16.mxu0 0
        %562 = vmatpush1.bf16.msra.mxu0 0
        %563 = vmatprep.subr.bf16.mxu0 0
        %564 = vmatpush1.bf16.msra.mxu0 0
        %565 = vmatprep.subr.bf16.mxu0 0
        %566 = vmatpush1.bf16.msra.mxu0 0
        %567 = vmatprep.mubr.bf16.mxu0 0
        %568 = vmatmul.mubr.bf16.gmra.mrb[0].mxu0 %v460
        %v569 = vpop.f32.mrb[0].mxu0
        %v570 = vadd.f32 0.0, %v569
        %v571 = vpop.f32.mrb[0].mxu0
        %v572 = vpop.f32.mrb[0].mxu0
        %v573 = vadd.f32 0.0, %v572
        %v574 = vpop.f32.mrb[0].mxu0
        %575 = vdwg.mxu0
        %v576 = vxor.u32 %v497, 2147483648
        %v577 = vxor.u32 %v500, 2147483648
        %v578 = vmul.f32 %v576, 1.442695
        %v579 = vpow.pop %v578
        %v580 = vmul.f32 %v577, 1.442695
        %v581 = vpow.pop %v580
        %v582 = vadd.f32 %v579, 1.0
        %v583 = vadd.f32 %v581, 1.0
        %v584 = vrcp.pop %v582
        %v585 = vmul.f32 1.0, %v584
        %v586 = vrcp.pop %v583
        %v587 = vmul.f32 1.0, %v586
        %v588 = vmul.f32 %v497, %v585
        %v589 = vmul.f32 %v500, %v587
        %v590 = vmul.f32 %v588, %v570
        %v591 = vmul.f32 %v589, %v573
        %v592 = vld [vmem:[%s397] sm:$0xff]
        %v593 = vld [vmem:[%s397 + $0x8] sm:$0xff]
        %v594 = vpack.c.bf16 %v591, %v590
        %v595 = vld [vmem:[%s408] sm:$0xf]
        %v596 = vld [vmem:[%s408 + $0x4] sm:$0xf]
        %v597 = vld [vmem:[%s408 + $0x8] sm:$0xf]
        %v598 = vld [vmem:[%s408 + $0xc] sm:$0xf]
        %v599 = vld [vmem:[%s408 + $0x10] sm:$0xf]
        %v600 = vld [vmem:[%s408 + $0x14] sm:$0xf]
        %v601 = vld [vmem:[%s408 + $0x18] sm:$0xf]
        %v602 = vld [vmem:[%s408 + $0x1c] sm:$0xf]
        %v603 = vld [vmem:[%s408 + $0x20] sm:$0xf]
        %v604 = vld [vmem:[%s408 + $0x24] sm:$0xf]
        %v605 = vld [vmem:[%s408 + $0x28] sm:$0xf]
        %v606 = vld [vmem:[%s408 + $0x2c] sm:$0xf]
        %v607 = vld [vmem:[%s408 + $0x30] sm:$0xf]
        %v608 = vld [vmem:[%s408 + $0x34] sm:$0xf]
        %v609 = vld [vmem:[%s408 + $0x38] sm:$0xf]
        %v610 = vld [vmem:[%s408 + $0x3c] sm:$0xf]
        %v627 = vunpack.c.l.b16 %v595
        %v628 = vunpack.c.l.b16 %v596
        %v629 = vunpack.c.l.b16 %v597
        %v630 = vunpack.c.l.b16 %v598
        %v631 = vunpack.c.l.b16 %v599
        %v632 = vunpack.c.l.b16 %v600
        %v633 = vunpack.c.l.b16 %v601
        %v634 = vunpack.c.l.b16 %v602
        %v635 = vunpack.c.l.b16 %v603
        %v636 = vunpack.c.l.b16 %v604
        %v637 = vunpack.c.l.b16 %v605
        %v638 = vunpack.c.l.b16 %v606
        %v639 = vunpack.c.l.b16 %v607
        %v640 = vunpack.c.l.b16 %v608
        %v641 = vunpack.c.l.b16 %v609
        %v642 = vunpack.c.l.b16 %v610
        %v643 = vpack.c.b16 %v628, %v627
        %v644 = vpack.c.b16 %v630, %v629
        %v645 = vpack.c.b16 %v632, %v631
        %v646 = vpack.c.b16 %v634, %v633
        %v647 = vpack.c.b16 %v636, %v635
        %v648 = vpack.c.b16 %v638, %v637
        %v649 = vpack.c.b16 %v640, %v639
        %v650 = vpack.c.b16 %v642, %v641
        %659 = vmatprep.subr.bf16.mxu0 0
        %660 = vmatpush1.bf16.msra.mxu0 %v643
        %661 = vmatprep.subr.bf16.mxu0 0
        %662 = vmatpush1.bf16.msra.mxu0 %v644
        %663 = vmatprep.subr.bf16.mxu0 0
        %664 = vmatpush1.bf16.msra.mxu0 %v645
        %665 = vmatprep.subr.bf16.mxu0 0
        %666 = vmatpush1.bf16.msra.mxu0 %v646
        %667 = vmatprep.subr.bf16.mxu0 0
        %668 = vmatpush1.bf16.msra.mxu0 %v647
        %669 = vmatprep.subr.bf16.mxu0 0
        %670 = vmatpush1.bf16.msra.mxu0 %v648
        %671 = vmatprep.subr.bf16.mxu0 0
        %672 = vmatpush1.bf16.msra.mxu0 %v649
        %673 = vmatprep.subr.bf16.mxu0 0
        %674 = vmatpush1.bf16.msra.mxu0 %v650
        %675 = vmatprep.subr.bf16.mxu0 0
        %676 = vmatpush1.bf16.msra.mxu0 0
        %677 = vmatprep.subr.bf16.mxu0 0
        %678 = vmatpush1.bf16.msra.mxu0 0
        %679 = vmatprep.subr.bf16.mxu0 0
        %680 = vmatpush1.bf16.msra.mxu0 0
        %681 = vmatprep.subr.bf16.mxu0 0
        %682 = vmatpush1.bf16.msra.mxu0 0
        %683 = vmatprep.subr.bf16.mxu0 0
        %684 = vmatpush1.bf16.msra.mxu0 0
        %685 = vmatprep.subr.bf16.mxu0 0
        %686 = vmatpush1.bf16.msra.mxu0 0
        %687 = vmatprep.subr.bf16.mxu0 0
        %688 = vmatpush1.bf16.msra.mxu0 0
        %689 = vmatprep.subr.bf16.mxu0 0
        %690 = vmatpush1.bf16.msra.mxu0 0
        %691 = vmatprep.mubr.bf16.mxu0 0
        %692 = vmatmul.mubr.bf16.gmra.mrb[0].mxu0 %v594
        %v693 = vpop.f32.mrb[0].mxu0
        %v694 = vadd.f32 0.0, %v693
        %v695 = vpop.f32.mrb[0].mxu0
        %v696 = vpop.f32.mrb[0].mxu0
        %v697 = vadd.f32 0.0, %v696
        %v698 = vpop.f32.mrb[0].mxu0
        %699 = vdwg.mxu0
        %v700 = vadd.f32 %v592, %v694
        %v701 = vadd.f32 %v593, %v697
        %702 = vst.msk [vmem:[%s397] sm:$0xff] %vm458, %v700
        %703 = vst.msk [vmem:[%s397 + $0x8] sm:$0xff] %vm458, %v701
        %s704 = sand.u32 %s142, 1
        %s705 = scalar_lea.sflag [#allocation5], %s704
        %s706 = sand.u32 %s142, 1
        %s707 = smul.addr %s706, 16
        %s708 = scalar_lea.vmem [#allocation4], %s707
        // Predicated region
        $region123: #{tpu_custom_call.1} parent=109 // pred_check
          %p709 = pneg %p152
        $region124: #{tpu_custom_call.1} parent=109 // pred_check_branch
          %711 = sbr.rel (%p709) target = $region126
        $region125: #{tpu_custom_call.1} parent=109 // pred_region
          %s712 = smul.u32 2, %s22
          %s714 = ssub.s32 256, 256
          %715 = vsyncadd %s705, %s714
          %s716 = smul.addr %s712, 128
          %s717 = scalar_lea.hbm %s4, %s716
          %s718 = sshll.u32 %s708, 4
          %s719 = int_to_ptr.vmem [resolvable:$true] %s718
          %724 = dma.vmem_to_hbm [thread:$0]  %s719, 256, %s717, %s705, 128, 128, 8
        $region126: #{tpu_custom_call.1} parent=109 // pred_fallthru
          _
      $region110: #{tpu_custom_call.1} parent=5 // pred_fallthru
        _
      %p725 = scmp.le.s32.totalorder 2, %s13
      // Predicated region
      $region127: #{tpu_custom_call.1} parent=5 // pred_check
        %p726 = pneg %p725
      $region128: #{tpu_custom_call.1} parent=5 // pred_check_branch
        %728 = sbr.rel (%p726) target = $region130
      $region129: #{tpu_custom_call.1} parent=5 // pred_region
        %s729 = ssub.s32 %s13, 2
        // Predicated region
        $region131: #{tpu_custom_call.1} parent=129 // pred_check
          %p730 = pneg %p158
        $region132: #{tpu_custom_call.1} parent=129 // pred_check_branch
          %732 = sbr.rel (%p730) target = $region134
        $region133: #{tpu_custom_call.1} parent=129 // pred_region
          %s733 = sand.u32 %s143, 1
          %s734 = scalar_lea.sflag [#allocation5], %s733
          %s735 = sand.u32 %s143, 1
          %s736 = smul.addr %s735, 16
          %s737 = scalar_lea.vmem [#allocation4], %s736
          %738 = dma.done %s734, 256
        $region134: #{tpu_custom_call.1} parent=129 // pred_fallthru
          _
      $region130: #{tpu_custom_call.1} parent=5 // pred_fallthru
        _
    $region6: #{tpu_custom_call.1} parent=1 // loop_footer
      %s17 = sadd.s32 1, %s13
    $region7: #{tpu_custom_call.1} parent=1 // loop_footer_branch
      %12 = sbr.rel target = $region3
    $region8: #{tpu_custom_call.1} parent=1 // loop_exit
      _
    %739 = vsyncpa [#allocation5], 1
    %s740 = scalar_lea.sflag [#allocation5], 1
    %741 = vsyncpa %s740, 1

</llo_original>
